<compile_context>
chip_gen: v5e
topology: v5e:2x2
jax: 0.10.0
libtpu: 0.0.40
codegen_flags: <defaults>
</compile_context>

<pallas_src>
import functools

import jax
import jax.numpy as jnp
from jax.experimental import pallas as pl
from jax.experimental.pallas import tpu as pltpu

LANE = 128
# Per-block byte budget for the streaming passes.  With double buffering of
# one input + one output block this keeps block buffers <= ~16 MiB, safely
# inside the 32 MiB scoped VMEM default (and v7x's 64 MiB physical VMEM).
_BLOCK_BYTE_BUDGET = 4 * 1024 * 1024
_VMEM_LIMIT_BYTES = 32 * 1024 * 1024


def _round_up(v, m):
    return ((v + m - 1) // m) * m


def _pick_tile_hw(c, itemsize, hw):
    """Largest lane tile (multiple of 128) within the per-block VMEM budget."""
    per_lane_bytes = max(1, c * itemsize)
    tile = (_BLOCK_BYTE_BUDGET // per_lane_bytes) // LANE * LANE
    tile = max(LANE, tile)
    return min(tile, _round_up(hw, LANE))


def _stable_sigmoid(z):
    # Numerically stable sigmoid via tanh (EUP), avoids exp overflow.
    return 0.5 * (jnp.tanh(0.5 * z) + 1.0)


# ---------------------------------------------------------------------------
# Pass 1: global average pool (squeeze), tiled over HW.
# ---------------------------------------------------------------------------
def _pool_kernel(x_ref, pooled_ref, *, inv_hw):
    t = pl.program_id(1)

    @pl.when(t == 0)
    def _():
        pooled_ref[...] = jnp.zeros_like(pooled_ref)

    # Accumulate the spatial sum in f32 regardless of input dtype.
    x = x_ref[...]
    pooled_ref[...] += jnp.sum(x.astype(jnp.float32), axis=-1, keepdims=True)

    @pl.when(t == pl.num_programs(1) - 1)
    def _():
        pooled_ref[...] = pooled_ref[...] * inv_hw


# ---------------------------------------------------------------------------
# Pass 2: excitation MLP for all batches at once (tiny, single grid step).
# ---------------------------------------------------------------------------
def _excite_kernel(pooled_ref, w1t_ref, b1_ref, w2t_ref, b2_ref, s_ref):
    pooled = pooled_ref[...]                                       # (N, C) f32
    h = jnp.dot(pooled, w1t_ref[...],
                preferred_element_type=jnp.float32) + b1_ref[...]  # (N, Cr)
    h = jnp.where(h >= 0, h, 0.2 * h)                              # LeakyReLU(0.2)
    z = jnp.dot(h, w2t_ref[...],
                preferred_element_type=jnp.float32) + b2_ref[...]  # (N, C)
    s_ref[...] = _stable_sigmoid(z)


# ---------------------------------------------------------------------------
# Pass 3: elementwise scale, streamed at HBM roofline.
# ---------------------------------------------------------------------------
def _scale_kernel(x_ref, s_ref, o_ref):
    # Multiply in the input dtype (no blanket upcast of the streamed slab).
    s = s_ref[...].astype(x_ref.dtype)          # (1, C, 1)
    o_ref[...] = x_ref[...] * s                 # (1, C, TILE_HW)


# ---------------------------------------------------------------------------
# Wrapper
# ---------------------------------------------------------------------------
def se_module(x, w1, b1, w2, b2):
    """x: (N, C, H, W).  w1: (Cr, C), b1: (Cr,), w2: (C, Cr), b2: (C,)."""
    N, C, H, W = x.shape
    Cr = w1.shape[0]
    HW = H * W
    itemsize = jnp.dtype(x.dtype).itemsize

    tile_hw = _pick_tile_hw(C, itemsize, HW)
    hw_pad = _round_up(HW, tile_hw)
    n_t = hw_pad // tile_hw

    x_flat = x.reshape(N, C, HW)
    if hw_pad != HW:
        # Lane-dense padding: zeros don't perturb the sum and keep stores unmasked.
        x_flat = jnp.pad(x_flat, ((0, 0), (0, 0), (0, hw_pad - HW)))

    compiler_params = pltpu.CompilerParams(
        dimension_semantics=("parallel", "arbitrary"),
        vmem_limit_bytes=_VMEM_LIMIT_BYTES,
    )

    # --- Pass 1: pooled means (N, C, 1) f32 ---
    pooled = pl.pallas_call(
        functools.partial(_pool_kernel, inv_hw=1.0 / HW),
        out_shape=jax.ShapeDtypeStruct((N, C, 1), jnp.float32),
        grid_spec=pltpu.PrefetchScalarGridSpec(
            num_scalar_prefetch=0,
            grid=(N, n_t),
            in_specs=[pl.BlockSpec((1, C, tile_hw), lambda n, t: (n, 0, t))],
            out_specs=pl.BlockSpec((1, C, 1), lambda n, t: (n, 0, 0)),
        ),
        compiler_params=compiler_params,
    )(x_flat)

    # --- Pass 2: excitation gates s (N, C) f32, all batches in one call ---
    s = pl.pallas_call(
        _excite_kernel,
        out_shape=jax.ShapeDtypeStruct((N, C), jnp.float32),
    )(
        pooled.reshape(N, C),
        w1.T.astype(jnp.float32),                # (C, Cr)
        b1.reshape(1, Cr).astype(jnp.float32),
        w2.T.astype(jnp.float32),                # (Cr, C)
        b2.reshape(1, C).astype(jnp.float32),
    )

    # --- Pass 3: tiled elementwise scale ---
    out_flat = pl.pallas_call(
        _scale_kernel,
        out_shape=jax.ShapeDtypeStruct((N, C, hw_pad), x.dtype),
        grid_spec=pltpu.PrefetchScalarGridSpec(
            num_scalar_prefetch=0,
            grid=(N, n_t),
            in_specs=[
                pl.BlockSpec((1, C, tile_hw), lambda n, t: (n, 0, t)),
                pl.BlockSpec((1, C, 1), lambda n, t: (n, 0, 0)),
            ],
            out_specs=pl.BlockSpec((1, C, tile_hw), lambda n, t: (n, 0, t)),
        ),
        compiler_params=pltpu.CompilerParams(
            dimension_semantics=("parallel", "parallel"),
            vmem_limit_bytes=_VMEM_LIMIT_BYTES,
        ),
    )(x_flat, s.reshape(N, C, 1))

    if hw_pad != HW:
        out_flat = out_flat[:, :, :HW]
    return out_flat.reshape(N, C, H, W)


def se_reference(x, w1, b1, w2, b2):
    pooled = jnp.mean(x.astype(jnp.float32), axis=(2, 3))           # (N, C)
    h = pooled @ w1.T.astype(jnp.float32) + b1
    h = jnp.where(h >= 0, h, 0.2 * h)
    s = jax.nn.sigmoid(h @ w2.T.astype(jnp.float32) + b2)           # (N, C)
    return x * s[:, :, None, None].astype(x.dtype)


if __name__ == "__main__":
    # Small shapes consistent with the module: N=2, C=8, H=W=16, reduction=4.
    N, C, H, W = 2, 8, 16, 16
    reduction = 4
    Cr = C // reduction

    key = jax.random.PRNGKey(0)
    kx, kw1, kb1, kw2, kb2 = jax.random.split(key, 5)

    x = jax.random.normal(kx, (N, C, H, W), dtype=jnp.float32)
    # 1x1 conv weights squeezed to 2D.
    w1 = jax.random.normal(kw1, (Cr, C), dtype=jnp.float32) * 0.2
    b1 = jax.random.normal(kb1, (Cr,), dtype=jnp.float32) * 0.1
    w2 = jax.random.normal(kw2, (C, Cr), dtype=jnp.float32) * 0.2
    b2 = jax.random.normal(kb2, (C,), dtype=jnp.float32) * 0.1

    out = se_module(x, w1, b1, w2, b2)
    jax.block_until_ready(out)

    ref = se_reference(x, w1, b1, w2, b2)
    assert out.shape == ref.shape
    assert jnp.allclose(out, ref, atol=1e-5, rtol=1e-5)

    print("KERNEL_OK")
</pallas_src>

<mosaic_0001>
module attributes {stable_mosaic.version = 11 : i64} {
  func.func @_pool_kernel(%arg0: i32, %arg1: i32, %arg2: memref<1x8x256xf32, #tpu.memory_space<vmem>>, %arg3: memref<1x8x1xf32, #tpu.memory_space<vmem>>) attributes {dimension_semantics = [#tpu.dimension_semantics<parallel>, #tpu.dimension_semantics<arbitrary>], iteration_bounds = array<i64: 2, 1>, scalar_prefetch = 0 : i64, scratch_operands = 0 : i64, tpu.core_type = #tpu.core_type<tc>, window_params = [{transform_indices = @transform_0, window_bounds = array<i64: 1, 8, 256>}, {transform_indices = @transform_1, window_bounds = array<i64: 1, 8, 1>}]} {
    %c0_i32 = arith.constant 0 : i32
    %0 = arith.cmpi eq, %arg1, %c0_i32 : i32
    %1 = arith.extui %0 : i1 to i32
    %c0_i32_0 = arith.constant 0 : i32
    %2 = arith.cmpi ne, %1, %c0_i32_0 : i32
    scf.if %2 {
      %cst_11 = arith.constant 0.000000e+00 : f32
      %12 = vector.broadcast %cst_11 : f32 to vector<1x8x1xf32>
      %c0_12 = arith.constant 0 : index
      %c0_13 = arith.constant 0 : index
      %c0_14 = arith.constant 0 : index
      %13 = vector.load %arg3[%c0_12, %c0_13, %c0_14] : memref<1x8x1xf32, #tpu.memory_space<vmem>>, vector<1x8x1xf32>
      tpu.vector_store %arg3[%c0_12, %c0_13, %c0_14], %12 {strides = array<i32>} : memref<1x8x1xf32, #tpu.memory_space<vmem>>, vector<1x8x1xf32>,
    } else {
    }
    %c0 = arith.constant 0 : index
    %c0_1 = arith.constant 0 : index
    %c0_2 = arith.constant 0 : index
    %3 = vector.load %arg2[%c0, %c0_1, %c0_2] : memref<1x8x256xf32, #tpu.memory_space<vmem>>, vector<1x8x256xf32>
    %c0_3 = arith.constant 0 : index
    %c0_4 = arith.constant 0 : index
    %c0_5 = arith.constant 0 : index
    %4 = vector.load %arg3[%c0_3, %c0_4, %c0_5] : memref<1x8x1xf32, #tpu.memory_space<vmem>>, vector<1x8x1xf32>
    %cst = arith.constant dense<0.000000e+00> : vector<1x8xf32>
    %5 = vector.multi_reduction <add>, %3, %cst [2] : vector<1x8x256xf32> to vector<1x8xf32>
    %6 = vector.shape_cast %5 : vector<1x8xf32> to vector<1x8x1xf32>
    %7 = arith.addf %4, %6 : vector<1x8x1xf32>
    %c0_6 = arith.constant 0 : index
    %c0_7 = arith.constant 0 : index
    %c0_8 = arith.constant 0 : index
    %8 = vector.load %arg3[%c0_6, %c0_7, %c0_8] : memref<1x8x1xf32, #tpu.memory_space<vmem>>, vector<1x8x1xf32>
    tpu.vector_store %arg3[%c0_6, %c0_7, %c0_8], %7 {strides = array<i32>} : memref<1x8x1xf32, #tpu.memory_space<vmem>>, vector<1x8x1xf32>,
    %c0_i32_9 = arith.constant 0 : i32
    %9 = arith.cmpi eq, %arg1, %c0_i32_9 : i32
    %10 = arith.extui %9 : i1 to i32
    %c0_i32_10 = arith.constant 0 : i32
    %11 = arith.cmpi ne, %10, %c0_i32_10 : i32
    scf.if %11 {
      %c0_11 = arith.constant 0 : index
      %c0_12 = arith.constant 0 : index
      %c0_13 = arith.constant 0 : index
      %12 = vector.load %arg3[%c0_11, %c0_12, %c0_13] : memref<1x8x1xf32, #tpu.memory_space<vmem>>, vector<1x8x1xf32>
      %cst_14 = arith.constant 3.906250e-03 : f32
      %13 = vector.broadcast %cst_14 : f32 to vector<1x8x1xf32>
      %14 = arith.mulf %12, %13 : vector<1x8x1xf32>
      %c0_15 = arith.constant 0 : index
      %c0_16 = arith.constant 0 : index
      %c0_17 = arith.constant 0 : index
      %15 = vector.load %arg3[%c0_15, %c0_16, %c0_17] : memref<1x8x1xf32, #tpu.memory_space<vmem>>, vector<1x8x1xf32>
      tpu.vector_store %arg3[%c0_15, %c0_16, %c0_17], %14 {strides = array<i32>} : memref<1x8x1xf32, #tpu.memory_space<vmem>>, vector<1x8x1xf32>,
    } else {
    }
    return
  }
  func.func @transform_0(%arg0: i32, %arg1: i32) -> (i32, i32, i32) {
    %c0_i32 = arith.constant 0 : i32
    %c0_i32_0 = arith.constant 0 : i32
    return %arg0, %c0_i32, %arg1 : i32, i32, i32
  }
  func.func @transform_1(%arg0: i32, %arg1: i32) -> (i32, i32, i32) {
    %c0_i32 = arith.constant 0 : i32
    %c0_i32_0 = arith.constant 0 : i32
    %c0_i32_1 = arith.constant 0 : i32
    return %arg0, %c0_i32, %c0_i32_0 : i32, i32, i32
  }
}

</mosaic_0001>

<llo_original>
// kernel: tpu_custom_call.1
$region0: #{tpu_custom_call.1}
  #allocation0 [shape = 'u32[]', space=smem, size = 0x4, offset = 0x4, fixed_abs, tag = 'smem constant byte address 0x4 - core index']
  #allocation1 [shape = 'u32[72,128]{1,0:T(1,128)}', space=vmem, size = 0x9000, scoped, tag = 'internal scratch']
  %s0 = inlined_call_operand.hbm [shape: f32[2,8,256], index: 0, kind: input, shape index: {}]
  %s1 = inlined_call_operand.vmem [shape: f32[2,8,1], index: 1, kind: output, shape index: {}]
  %s2 = sld [smem:[#allocation0]]
  $region49: #{tpu_custom_call.1} parent=0
    _
  %s4 = ssub.s32 1, %s2
  %s5 = scalar_select 0, %s4, %s2
  $region1: #{tpu_custom_call.1} parent=0
    #allocation2 [shape = 'u8[16384]{0}', space=vmem, size = 0x4000, scoped, tag = 'input window, operand 0']
    #allocation3 [shape = 's32[2]{0}', space=sflag, size = 0x8, scoped, tag = 'scoped memory for tpu_custom_call.1']
    %6 = vsyncpa [#allocation3], 0
    %s7 = scalar_lea.sflag [#allocation3], 1
    %8 = vsyncpa %s7, 0
    loop: start=0, step=1, limit=4
    $region2: #{tpu_custom_call.1} parent=1 // loop_pre_header
      _
    $region3: #{tpu_custom_call.1} parent=1 // loop_header
      %s10 = sphi 0, %s14
      %p11 = scmp.ge.s32.totalorder %s10, 4
      %s17 = sphi 0, %s29
      %s18 = sphi 0, %s25
      %s19 = sphi 0, %s17
      %s20 = sphi 0, %s18
      %s21 = sphi 0, %s19
      %s22 = sphi 0, %s20
      %s34 = sphi 0, %s36
      %s37 = sphi 0, %s34
      %s38 = sphi 0, %s37
      %s54 = sphi 0, %s38
      %s60 = sphi 0, %s62
      %s63 = sphi 0, %s60
      %s64 = sphi 0, %s63
      %s80 = sphi 0, %s64
    $region4: #{tpu_custom_call.1} parent=1 // loop_header_branch
      %13 = sbr.rel (%p11) target = $region8
    $region5: #{tpu_custom_call.1} parent=1 // loop_body
      %s15 = ssub.s32 %s10, 1
      %s16 = ssub.s32 %s10, 2
      %s23 = sadd.s32 1, %s18
      %p24 = scmp.ge.s32.totalorder %s23, 1
      %s25 = scalar_select %p24, 0, %s23
      %s26 = sadd.s32 1, %s17
      %s27 = scalar_select %p24, %s26, %s17
      %p28 = scmp.ge.s32.totalorder %s27, 2
      %s29 = scalar_select %p28, 0, %s27
      %s30 = ssub.s32 %s17, %s29
      %s31 = ssub.s32 %s18, %s25
      %s32 = sor.u32 %s30, %s31
      %p33 = scmp.eq.s32.totalorder %s32, 0
      %s35 = sadd.s32 %s34, 1
      %s36 = scalar_select %p33, %s34, %s35
      %p39 = pneg %p33
      %p40 = scmp.eq.s32.totalorder %s10, 1
      %p41 = por %p39, %p40
      %p42 = scmp.ne.s32.totalorder %s34, %s37
      %p43 = scmp.eq.s32.totalorder %s10, 0
      %p44 = por %p42, %p43
      %p45 = scmp.ne.s32.totalorder %s34, %s37
      %p46 = scmp.eq.s32.totalorder %s15, 1
      %p47 = por %p45, %p46
      %p48 = scmp.ne.s32.totalorder %s37, %s38
      %p49 = scmp.eq.s32.totalorder %s15, 0
      %p50 = por %p48, %p49
      %p51 = scmp.ne.s32.totalorder %s37, %s38
      %p52 = scmp.eq.s32.totalorder %s16, 1
      %p53 = por %p51, %p52
      %p55 = scmp.ne.s32.totalorder %s38, %s54
      %p56 = scmp.eq.s32.totalorder %s16, 0
      %p57 = por %p55, %p56
      %s58 = ssub.s32 %s17, %s29
      %p59 = scmp.eq.s32.totalorder %s58, 0
      %s61 = sadd.s32 %s60, 1
      %s62 = scalar_select %p59, %s60, %s61
      %p65 = pneg %p59
      %p66 = scmp.eq.s32.totalorder %s10, 1
      %p67 = por %p65, %p66
      %p68 = scmp.ne.s32.totalorder %s60, %s63
      %p69 = scmp.eq.s32.totalorder %s10, 0
      %p70 = por %p68, %p69
      %p71 = scmp.ne.s32.totalorder %s60, %s63
      %p72 = scmp.eq.s32.totalorder %s15, 1
      %p73 = por %p71, %p72
      %p74 = scmp.ne.s32.totalorder %s63, %s64
      %p75 = scmp.eq.s32.totalorder %s15, 0
      %p76 = por %p74, %p75
      %p77 = scmp.ne.s32.totalorder %s63, %s64
      %p78 = scmp.eq.s32.totalorder %s16, 1
      %p79 = por %p77, %p78
      %p81 = scmp.ne.s32.totalorder %s64, %s80
      %p82 = scmp.eq.s32.totalorder %s16, 0
      %p83 = por %p81, %p82
      %p84 = scmp.le.s32.totalorder 1, %s10
      %p85 = scmp.lt.s32.totalorder %s10, 3
      %p86 = pnand %p84, %p85
      %p87 = pneg %p86
      // Predicated region
      $region9: #{tpu_custom_call.1} parent=5 // pred_check
        _
      $region10: #{tpu_custom_call.1} parent=5 // pred_check_branch
        %89 = sbr.rel (%p86) target = $region12
      $region11: #{tpu_custom_call.1} parent=5 // pred_region
        %s90 = ssub.s32 %s10, 1
      $region12: #{tpu_custom_call.1} parent=5 // pred_fallthru
        _
      %p91 = scmp.lt.s32.totalorder %s10, 2
      // Predicated region
      $region13: #{tpu_custom_call.1} parent=5 // pred_check
        %p92 = pneg %p91
      $region14: #{tpu_custom_call.1} parent=5 // pred_check_branch
        %94 = sbr.rel (%p92) target = $region16
      $region15: #{tpu_custom_call.1} parent=5 // pred_region
        // Predicated region
        $region17: #{tpu_custom_call.1} parent=15 // pred_check
          %p95 = pneg %p44
        $region18: #{tpu_custom_call.1} parent=15 // pred_check_branch
          %97 = sbr.rel (%p95) target = $region20
        $region19: #{tpu_custom_call.1} parent=15 // pred_region
          %s98 = sand.u32 %s34, 1
          %s99 = scalar_lea.sflag [#allocation3], %s98
          %s100 = sand.u32 %s34, 1
          %s101 = smul.addr %s100, 16
          %s102 = scalar_lea.vmem [#allocation2], %s101
          %s103 = smul.u32 2, %s18
          %105 = vsyncadd %s99, 0
          %s106 = smul.addr %s17, 2
          %s107 = sadd.s32 %s103, %s106
          %s108 = smul.addr %s107, 8
          %s109 = scalar_lea.hbm %s0, %s108
          %s111 = sshll.u32 %s109, 4
          %s112 = int_to_ptr.hbm [resolvable:$true] %s111
          %s113 = sshll.u32 %s102, 4
          %s114 = int_to_ptr.vmem [resolvable:$true] %s113
          %116 = dma.hbm_to_vmem [thread:$0]  %s112, 256, %s114, %s99
        $region20: #{tpu_custom_call.1} parent=15 // pred_fallthru
          _
      $region16: #{tpu_custom_call.1} parent=5 // pred_fallthru
        _
      %p117 = scmp.le.s32.totalorder 1, %s10
      %p118 = scmp.lt.s32.totalorder %s10, 3
      %p119 = pnand %p117, %p118
      %p120 = pneg %p119
      // Predicated region
      $region21: #{tpu_custom_call.1} parent=5 // pred_check
        _
      $region22: #{tpu_custom_call.1} parent=5 // pred_check_branch
        %122 = sbr.rel (%p119) target = $region24
      $region23: #{tpu_custom_call.1} parent=5 // pred_region
        %s123 = ssub.s32 %s10, 1
        %s124 = sand.u32 %s37, 1
        %s125 = scalar_lea.sflag [#allocation3], %s124
        %s126 = sand.u32 %s37, 1
        %s127 = smul.addr %s126, 16
        %s128 = scalar_lea.vmem [#allocation2], %s127
        // Predicated region
        $region25: #{tpu_custom_call.1} parent=23 // pred_check
          %p129 = pneg %p50
        $region26: #{tpu_custom_call.1} parent=23 // pred_check_branch
          %131 = sbr.rel (%p129) target = $region28
        $region27: #{tpu_custom_call.1} parent=23 // pred_region
          %133 = dma.done %s125, 256
        $region28: #{tpu_custom_call.1} parent=23 // pred_fallthru
          _
        %s134 = sand.u32 %s37, 1
        %s135 = scalar_lea.sflag [#allocation3], %s134
        %s136 = sand.u32 %s37, 1
        %s137 = smul.addr %s136, 16
        %s138 = scalar_lea.vmem [#allocation2], %s137
        %p139 = pneg %p50
        %p140 = pneg %p47
        %p141 = pneg %p76
        %p142 = pneg %p73
        %p143 = scmp.lt.s32.totalorder %s19, 1
        %s144 = scalar_select %p143, %s19, 1
        %s145 = smul.addr %s144, 8
        %s146 = scalar_lea.vmem %s1, %s145
        %s147 = smul.u32 2, %s20
        %p148 = scmp.lt.s32.totalorder %s19, 1
        %s149 = scalar_select %p148, %s19, 1
        %s150 = smul.addr %s149, 8
        %s151 = scalar_lea.vmem %s1, %s150
        %p152 = scmp.eq.s32.totalorder %s20, 0
        // Predicated region
        $region29: #{tpu_custom_call.1} parent=23 // pred_check
          %p153 = pneg %p152
        $region30: #{tpu_custom_call.1} parent=23 // pred_check_branch
          %155 = sbr.rel (%p153) target = $region32
        $region31: #{tpu_custom_call.1} parent=23 // pred_region
          %vm156 = vcmask 7168
          %157 = vst.msk [vmem:[%s151] sm:$0xff] %vm156, 0.0
        $region32: #{tpu_custom_call.1} parent=23 // pred_fallthru
          _
        %v158 = vld [vmem:[%s128] sm:$0xff]
        %v159 = vld [vmem:[%s128 + $0x8] sm:$0xff]
        %v160 = vld [vmem:[%s151] sm:$0xff]
        %v161 = vadd.f32 %v158, %v159
        %162 = vadd.xlane.f32.xlu0 %v161
        %v163 = vpop.xlane.xlu0 %162
        %v164 = vadd.f32 %v160, %v163
        %vm165 = vcmask 7168
        %166 = vst.msk [vmem:[%s151] sm:$0xff] %vm165, %v164
        // Predicated region
        $region33: #{tpu_custom_call.1} parent=23 // pred_check
          %p167 = pneg %p152
        $region34: #{tpu_custom_call.1} parent=23 // pred_check_branch
          %169 = sbr.rel (%p167) target = $region36
        $region35: #{tpu_custom_call.1} parent=23 // pred_region
          %v170 = vld [vmem:[%s151] sm:$0xff]
          %v171 = vmul.f32 %v170, 0.00390625
          %172 = vst.msk [vmem:[%s151] sm:$0xff] %vm165, %v171
        $region36: #{tpu_custom_call.1} parent=23 // pred_fallthru
          _
        %p173 = scmp.lt.s32.totalorder %s19, 1
        %s174 = scalar_select %p173, %s19, 1
        %s175 = smul.addr %s174, 8
        %s176 = scalar_lea.vmem %s1, %s175
        // Predicated region
        $region37: #{tpu_custom_call.1} parent=23 // pred_check
          %p177 = pneg %p73
        $region38: #{tpu_custom_call.1} parent=23 // pred_check_branch
          %179 = sbr.rel (%p177) target = $region40
        $region39: #{tpu_custom_call.1} parent=23 // pred_region
          _
        $region40: #{tpu_custom_call.1} parent=23 // pred_fallthru
          _
      $region24: #{tpu_custom_call.1} parent=5 // pred_fallthru
        _
      %p180 = scmp.le.s32.totalorder 2, %s10
      // Predicated region
      $region41: #{tpu_custom_call.1} parent=5 // pred_check
        %p181 = pneg %p180
      $region42: #{tpu_custom_call.1} parent=5 // pred_check_branch
        %183 = sbr.rel (%p181) target = $region44
      $region43: #{tpu_custom_call.1} parent=5 // pred_region
        %s184 = ssub.s32 %s10, 2
        // Predicated region
        $region45: #{tpu_custom_call.1} parent=43 // pred_check
          %p185 = pneg %p79
        $region46: #{tpu_custom_call.1} parent=43 // pred_check_branch
          %187 = sbr.rel (%p185) target = $region48
        $region47: #{tpu_custom_call.1} parent=43 // pred_region
          %p188 = scmp.lt.s32.totalorder %s21, 1
          %s189 = scalar_select %p188, %s21, 1
          %s190 = smul.addr %s189, 8
          %s191 = scalar_lea.vmem %s1, %s190
        $region48: #{tpu_custom_call.1} parent=43 // pred_fallthru
          _
      $region44: #{tpu_custom_call.1} parent=5 // pred_fallthru
        _
    $region6: #{tpu_custom_call.1} parent=1 // loop_footer
      %s14 = sadd.s32 1, %s10
    $region7: #{tpu_custom_call.1} parent=1 // loop_footer_branch
      %9 = sbr.rel target = $region3
    $region8: #{tpu_custom_call.1} parent=1 // loop_exit
      _
    %192 = vsyncpa [#allocation3], 1
    %s193 = scalar_lea.sflag [#allocation3], 1
    %194 = vsyncpa %s193, 1

</llo_original>
